<compile_context>
chip_gen: v5e
topology: v5e:2x2
jax: 0.10.0
libtpu: 0.0.40
codegen_flags: <defaults>
</compile_context>

<pallas_src>
import math

import jax
import jax.numpy as jnp
from jax import lax
from jax.experimental import pallas as pl
from jax.experimental.pallas import tpu as pltpu

LANES = 128
ROW_BYTES = LANES * 4          # one 128-lane f32 row
MAX_TILE_ROWS = 8192           # 4 MiB per stream per buffer at the cap


def _round_down8(x: int) -> int:
    return (x // 8) * 8


def _vmem_capacity_bytes() -> int:
    try:
        return int(pltpu.get_tpu_info().vmem_capacity_bytes)
    except Exception:
        return 64 << 20        # conservative default (v7x per-TensorCore)


def _make_kernel(tile_rows: int, thr_is_scalar: bool):
    n_groups = tile_rows // 8
    unroll = max(1, min(8, n_groups))

    def reduce_tile(yp_ref, yt_ref, get_th, tp_ref, pp_ref):
        zeros = jnp.zeros((8, LANES), jnp.float32)

        def body(g, carry):
            acc_tp, acc_pp = carry
            r0 = pl.multiple_of(g * 8, 8)
            yp = yp_ref[pl.ds(r0, 8), :]          # (8,128)
            yt = yt_ref[pl.ds(r0, 8), :]          # (8,128)
            th = get_th(r0)                       # scalar, (8,1) or (8,128)
            pred = yp >= th
            acc_tp = acc_tp + (pred & (yt >= th)).astype(jnp.float32)
            acc_pp = acc_pp + pred.astype(jnp.float32)
            return acc_tp, acc_pp

        acc_tp, acc_pp = lax.fori_loop(0, n_groups, body, (zeros, zeros),
                                       unroll=unroll)
        tp_ref[...] = acc_tp
        pp_ref[...] = acc_pp

    if thr_is_scalar:
        def kernel(yp_ref, yt_ref, th_sref, tp_ref, pp_ref):
            th = th_sref[0]                       # SMEM scalar, read once
            reduce_tile(yp_ref, yt_ref, lambda r0: th, tp_ref, pp_ref)
    else:
        def kernel(yp_ref, yt_ref, th_ref, tp_ref, pp_ref):
            reduce_tile(yp_ref, yt_ref,
                        lambda r0: th_ref[pl.ds(r0, 8), :], tp_ref, pp_ref)
    return kernel


def cmal_precision(yPred, yTrue, thresholds):
    """Pallas implementation of CMALPrecision.forward. Returns a f32 scalar."""
    yPred = jnp.asarray(yPred, jnp.float32)
    yTrue = jnp.asarray(yTrue, jnp.float32)
    thresholds = jnp.asarray(thresholds, jnp.float32)

    shape = jnp.broadcast_shapes(yPred.shape, yTrue.shape, thresholds.shape)
    n_valid = math.prod(shape)

    if n_valid == 0:
        # torch.mean over an empty tensor is NaN -> result is NaN.
        return jnp.float32(jnp.nan)

    # Avoid materializing full-size broadcast copies in the common case where
    # the data already has the full broadcast shape.
    # TODO(synk): stream a genuinely-broadcast yPred/yTrue with a repeating
    # index_map instead of materializing the broadcast (rare case).
    yp_full = yPred if yPred.shape == shape else jnp.broadcast_to(yPred, shape)
    yt_full = yTrue if yTrue.shape == shape else jnp.broadcast_to(yTrue, shape)
    yp_flat = yp_full.reshape(-1)
    yt_flat = yt_full.reshape(-1)

    rows = n_valid // LANES
    tail_len = n_valid - rows * LANES

    # ---------------- threshold representation ----------------
    thr_is_scalar = (thresholds.size == 1)
    thr_smem = None       # (1,) SMEM scalar
    th_rows = None        # (rows, 1) per-row column
    th_full_flat = None   # (n_valid,) full stream (fallback)
    if thr_is_scalar:
        thr_smem = thresholds.reshape((1,))
    else:
        nd = len(shape)
        t_shape = (1,) * (nd - thresholds.ndim) + thresholds.shape
        k = 0
        for d in reversed(range(nd)):
            if t_shape[d] == 1:
                k += 1
            else:
                break
        chunk = math.prod(shape[nd - k:]) if k > 0 else 1
        if chunk % LANES == 0:
            # Thresholds constant over every 128-lane row (e.g. (1,C,1,1) vs
            # (B,C,H,W)): stream a tiny (rows,1) column.  tail_len == 0 here.
            reps = chunk // LANES
            t_lead = jnp.broadcast_to(
                thresholds.reshape(t_shape[:nd - k]), shape[:nd - k]).reshape(-1)
            th_rows = jnp.repeat(t_lead, reps).reshape(rows, 1)
        else:
            th_full_flat = (thresholds if thresholds.shape == shape
                            else jnp.broadcast_to(thresholds, shape)).reshape(-1)

    # ---------------- tile size & grid ----------------
    # The (tile_rows,1) threshold column lane-pads to 128 in VMEM, so it costs
    # the same as a full data block -> count it as a full stream.
    n_vmem_streams = 2 if thr_is_scalar else 3
    vmem_budget = min(_vmem_capacity_bytes() // 2, 32 << 20)
    tile_cap = _round_down8(vmem_budget // (n_vmem_streams * 2 * ROW_BYTES))
    tile_rows = max(8, min(MAX_TILE_ROWS, tile_cap))
    tile_rows = min(tile_rows, max(8, _round_down8(rows)))
    if rows >= 16:
        # Keep >= 2 grid steps so "parallel" can shard across both v7x TCs.
        tile_rows = min(tile_rows, max(8, _round_down8(rows // 2)))

    full_tiles = rows // tile_rows
    kernel_rows = full_tiles * tile_rows

    tp_kernel = jnp.float32(0.0)
    pp_kernel = jnp.float32(0.0)

    if full_tiles >= 1:
        if tail_len == 0:
            yp2 = yp_flat.reshape(rows, LANES)
            yt2 = yt_flat.reshape(rows, LANES)
        else:
            yp2 = yp_flat[:rows * LANES].reshape(rows, LANES)
            yt2 = yt_flat[:rows * LANES].reshape(rows, LANES)

        data_spec = pl.BlockSpec((tile_rows, LANES), lambda i: (i, 0))
        out_spec = pl.BlockSpec((8, LANES), lambda i: (0, i))   # lane-dense

        if thr_is_scalar:
            th_arg = thr_smem
            th_spec = pl.BlockSpec(memory_space=pltpu.MemorySpace.SMEM)
        elif th_rows is not None:
            th_arg = th_rows
            th_spec = pl.BlockSpec((tile_rows, 1), lambda i: (i, 0))
        else:
            th2 = (th_full_flat if tail_len == 0
                   else th_full_flat[:rows * LANES]).reshape(rows, LANES)
            th_arg = th2
            th_spec = pl.BlockSpec((tile_rows, LANES), lambda i: (i, 0))

        vmem_limit = n_vmem_streams * 2 * tile_rows * ROW_BYTES + (4 << 20)

        tp_part, pp_part = pl.pallas_call(
            _make_kernel(tile_rows, thr_is_scalar),
            out_shape=(
                jax.ShapeDtypeStruct((8, full_tiles * LANES), jnp.float32),
                jax.ShapeDtypeStruct((8, full_tiles * LANES), jnp.float32)),
            grid_spec=pltpu.PrefetchScalarGridSpec(
                num_scalar_prefetch=0,
                grid=(full_tiles,),
                in_specs=[data_spec, data_spec, th_spec],
                out_specs=[out_spec, out_spec],
            ),
            compiler_params=pltpu.CompilerParams(
                dimension_semantics=("parallel",),
                vmem_limit_bytes=int(vmem_limit),
            ),
        )(yp2, yt2, th_arg)

        tp_kernel = jnp.sum(tp_part)
        pp_kernel = jnp.sum(pp_part)

    # ---------------- tiny JAX epilogue for the ragged tail ----------------
    start = kernel_rows * LANES
    if start < n_valid:
        yp_t = yp_flat[start:]
        yt_t = yt_flat[start:]
        if thr_is_scalar:
            th_t = thr_smem[0]
        elif th_rows is not None:
            th_t = jnp.repeat(th_rows[kernel_rows:rows, 0], LANES)
        else:
            th_t = th_full_flat[start:]
        pred_t = yp_t >= th_t
        tp_tail = jnp.sum((pred_t & (yt_t >= th_t)).astype(jnp.float32))
        pp_tail = jnp.sum(pred_t.astype(jnp.float32))
    else:
        tp_tail = jnp.float32(0.0)
        pp_tail = jnp.float32(0.0)

    tp_sum = tp_kernel + tp_tail
    pp_sum = pp_kernel + pp_tail
    inv_n = jnp.float32(1.0 / n_valid)
    tp = tp_sum * inv_n
    fp = (pp_sum - tp_sum) * inv_n
    return tp / (tp + fp + jnp.float32(1e-8))


def _reference(yPred, yTrue, thresholds):
    pred_pos = (yPred >= thresholds).astype(jnp.float32)
    tp = pred_pos * (yTrue >= thresholds).astype(jnp.float32)
    fp = pred_pos * (yTrue < thresholds).astype(jnp.float32)
    tp = jnp.mean(tp)
    fp = jnp.mean(fp)
    return tp / (tp + fp + 1e-8)


if __name__ == "__main__":
    key = jax.random.PRNGKey(0)
    k1, k2, k3 = jax.random.split(key, 3)

    # Small shapes consistent with a generic (B, C, H, W) prediction tensor.
    shape = (2, 4, 16, 16)
    yPred = jax.random.uniform(k1, shape, jnp.float32)
    yTrue = jax.random.uniform(k2, shape, jnp.float32)
    # per-channel thresholds, broadcast like PyTorch would
    thresholds = jax.random.uniform(k3, (1, 4, 1, 1), jnp.float32) * 0.5 + 0.25

    out = jax.block_until_ready(cmal_precision(yPred, yTrue, thresholds))
    ref = _reference(yPred, yTrue, thresholds)
    assert jnp.allclose(out, ref, atol=1e-6), (out, ref)

    # Scalar-threshold fast path (SMEM threshold, 2 VMEM streams only).
    thr_s = jnp.float32(0.5)
    out_s = jax.block_until_ready(cmal_precision(yPred, yTrue, thr_s))
    ref_s = _reference(yPred, yTrue, thr_s)
    assert jnp.allclose(out_s, ref_s, atol=1e-6), (out_s, ref_s)

    # Tiny / non-128-aligned input handled entirely by the JAX epilogue path.
    yp_small = jax.random.uniform(k1, (3, 5, 7), jnp.float32)
    yt_small = jax.random.uniform(k2, (3, 5, 7), jnp.float32)
    out_t = jax.block_until_ready(cmal_precision(yp_small, yt_small, thr_s))
    ref_t = _reference(yp_small, yt_small, thr_s)
    assert jnp.allclose(out_t, ref_t, atol=1e-6), (out_t, ref_t)

    print("KERNEL_OK")
</pallas_src>

<mosaic_0001>
module attributes {stable_mosaic.version = 11 : i64} {
  func.func @kernel(%arg0: i32, %arg1: memref<8x128xf32, #tpu.memory_space<vmem>>, %arg2: memref<8x128xf32, #tpu.memory_space<vmem>>, %arg3: memref<8x1xf32, #tpu.memory_space<vmem>>, %arg4: memref<8x128xf32, #tpu.memory_space<vmem>>, %arg5: memref<8x128xf32, #tpu.memory_space<vmem>>) attributes {dimension_semantics = [#tpu.dimension_semantics<parallel>], iteration_bounds = array<i64: 2>, scalar_prefetch = 0 : i64, scratch_operands = 0 : i64, tpu.core_type = #tpu.core_type<tc>, window_params = [{transform_indices = @transform_0, window_bounds = array<i64: 8, 128>}, {transform_indices = @transform_1, window_bounds = array<i64: 8, 128>}, {transform_indices = @transform_2, window_bounds = array<i64: 8, 1>}, {transform_indices = @transform_3, window_bounds = array<i64: 8, 128>}, {transform_indices = @transform_4, window_bounds = array<i64: 8, 128>}]} {
    %cst = arith.constant 0.000000e+00 : f32
    %0 = vector.broadcast %cst : f32 to vector<8x128xf32>
    %c0_i32 = arith.constant 0 : i32
    %c8_i32 = arith.constant 8 : i32
    %1 = arith.muli %c0_i32, %c8_i32 : i32
    %2 = tpu.assume_multiple %1, 8 : i32
    %3 = arith.index_cast %2 : i32 to index
    %c0 = arith.constant 0 : index
    %4 = vector.load %arg1[%3, %c0] : memref<8x128xf32, #tpu.memory_space<vmem>>, vector<8x128xf32>
    %5 = arith.index_cast %2 : i32 to index
    %c0_0 = arith.constant 0 : index
    %6 = vector.load %arg2[%5, %c0_0] : memref<8x128xf32, #tpu.memory_space<vmem>>, vector<8x128xf32>
    %7 = arith.index_cast %2 : i32 to index
    %c0_1 = arith.constant 0 : index
    %8 = vector.load %arg3[%7, %c0_1] : memref<8x1xf32, #tpu.memory_space<vmem>>, vector<8x1xf32>
    %9 = vector.broadcast %8 : vector<8x1xf32> to vector<8x128xf32>
    %10 = arith.cmpf oge, %4, %9 : vector<8x128xf32>
    %11 = vector.broadcast %8 : vector<8x1xf32> to vector<8x128xf32>
    %12 = arith.cmpf oge, %6, %11 : vector<8x128xf32>
    %13 = arith.andi %10, %12 : vector<8x128xi1>
    %14 = arith.extui %13 : vector<8x128xi1> to vector<8x128xi32>
    %15 = arith.sitofp %14 : vector<8x128xi32> to vector<8x128xf32>
    %16 = arith.addf %0, %15 : vector<8x128xf32>
    %17 = arith.extui %10 : vector<8x128xi1> to vector<8x128xi32>
    %18 = arith.sitofp %17 : vector<8x128xi32> to vector<8x128xf32>
    %19 = arith.addf %0, %18 : vector<8x128xf32>
    %c1_i32 = arith.constant 1 : i32
    %c0_2 = arith.constant 0 : index
    %c0_3 = arith.constant 0 : index
    %20 = vector.load %arg4[%c0_2, %c0_3] : memref<8x128xf32, #tpu.memory_space<vmem>>, vector<8x128xf32>
    tpu.vector_store %arg4[%c0_2, %c0_3], %16 {strides = array<i32>} : memref<8x128xf32, #tpu.memory_space<vmem>>, vector<8x128xf32>,
    %c0_4 = arith.constant 0 : index
    %c0_5 = arith.constant 0 : index
    %21 = vector.load %arg5[%c0_4, %c0_5] : memref<8x128xf32, #tpu.memory_space<vmem>>, vector<8x128xf32>
    tpu.vector_store %arg5[%c0_4, %c0_5], %19 {strides = array<i32>} : memref<8x128xf32, #tpu.memory_space<vmem>>, vector<8x128xf32>,
    return
  }
  func.func @transform_0(%arg0: i32) -> (i32, i32) {
    %c0_i32 = arith.constant 0 : i32
    %c0_i32_0 = arith.constant 0 : i32
    return %arg0, %c0_i32 : i32, i32
  }
  func.func @transform_1(%arg0: i32) -> (i32, i32) {
    %c0_i32 = arith.constant 0 : i32
    %c0_i32_0 = arith.constant 0 : i32
    return %arg0, %c0_i32 : i32, i32
  }
  func.func @transform_2(%arg0: i32) -> (i32, i32) {
    %c0_i32 = arith.constant 0 : i32
    %c0_i32_0 = arith.constant 0 : i32
    return %arg0, %c0_i32 : i32, i32
  }
  func.func @transform_3(%arg0: i32) -> (i32, i32) {
    %c0_i32 = arith.constant 0 : i32
    %c0_i32_0 = arith.constant 0 : i32
    return %c0_i32, %arg0 : i32, i32
  }
  func.func @transform_4(%arg0: i32) -> (i32, i32) {
    %c0_i32 = arith.constant 0 : i32
    %c0_i32_0 = arith.constant 0 : i32
    return %c0_i32, %arg0 : i32, i32
  }
}

</mosaic_0001>

<llo_original>
// kernel: tpu_custom_call.1
$region0: #{tpu_custom_call.1}
  #allocation0 [shape = 'u32[]', space=smem, size = 0x4, offset = 0x4, fixed_abs, tag = 'smem constant byte address 0x4 - core index']
  #allocation1 [shape = 'u32[72,128]{1,0:T(1,128)}', space=vmem, size = 0x9000, scoped, tag = 'internal scratch']
  %s0 = inlined_call_operand.vmem [shape: f32[16,128], index: 0, kind: input, shape index: {}]
  %s1 = inlined_call_operand.hbm [shape: f32[16,128], index: 1, kind: input, shape index: {}]
  %s2 = inlined_call_operand.vmem [shape: f32[16,1], index: 2, kind: input, shape index: {}]
  %s3 = inlined_call_operand.hbm [shape: f32[8,256], index: 3, kind: output, shape index: {0}]
  %s4 = inlined_call_operand.hbm [shape: f32[8,256], index: 4, kind: output, shape index: {1}]
  %5 = xla_tuple %s3, %s4
  %s6 = sld [smem:[#allocation0]]
  $region57: #{tpu_custom_call.1} parent=0
    _
  %s8 = ssub.s32 1, %s6
  %s9 = scalar_select 0, %s8, %s6
  $region1: #{tpu_custom_call.1} parent=0
    #allocation2 [shape = 'u8[8192]{0}', space=vmem, size = 0x2000, scoped, tag = 'input window, operand 1']
    #allocation3 [shape = 's32[2]{0}', space=sflag, size = 0x8, scoped, tag = 'scoped memory for tpu_custom_call.1']
    #allocation4 [shape = 's32[2]{0}', space=sflag, size = 0x8, scoped, tag = 'scoped memory for tpu_custom_call.1']
    #allocation5 [shape = 'u8[8192]{0}', space=vmem, size = 0x2000, scoped, tag = 'output window, operand 0']
    #allocation6 [shape = 'u8[8192]{0}', space=vmem, size = 0x2000, scoped, tag = 'output window, operand 1']
    #allocation7 [shape = 's32[2]{0}', space=sflag, size = 0x8, scoped, tag = 'scoped memory for tpu_custom_call.1']
    %10 = vsyncpa [#allocation3], 0
    %s11 = scalar_lea.sflag [#allocation3], 1
    %12 = vsyncpa %s11, 0
    %13 = vsyncpa [#allocation4], 0
    %s14 = scalar_lea.sflag [#allocation4], 1
    %15 = vsyncpa %s14, 0
    %16 = vsyncpa [#allocation7], 0
    %s17 = scalar_lea.sflag [#allocation7], 1
    %18 = vsyncpa %s17, 0
    loop: start=0, step=1, limit=4
    $region2: #{tpu_custom_call.1} parent=1 // loop_pre_header
      _
    $region3: #{tpu_custom_call.1} parent=1 // loop_header
      %s20 = sphi 0, %s24
      %p21 = scmp.ge.s32.totalorder %s20, 4
      %s30 = sphi 0, %s32
      %s33 = sphi 0, %s30
      %s34 = sphi 0, %s33
      %s50 = sphi 0, %s34
      %s56 = sphi 0, %s58
      %s59 = sphi 0, %s56
      %s60 = sphi 0, %s59
      %s76 = sphi 0, %s60
      %s82 = sphi 0, %s84
      %s85 = sphi 0, %s82
      %s86 = sphi 0, %s85
      %s102 = sphi 0, %s86
      %s108 = sphi 0, %s110
      %s111 = sphi 0, %s108
      %s112 = sphi 0, %s111
      %s128 = sphi 0, %s112
      %s134 = sphi 0, %s136
      %s137 = sphi 0, %s134
      %s138 = sphi 0, %s137
      %s154 = sphi 0, %s138
    $region4: #{tpu_custom_call.1} parent=1 // loop_header_branch
      %23 = sbr.rel (%p21) target = $region8
    $region5: #{tpu_custom_call.1} parent=1 // loop_body
      %s25 = ssub.s32 %s20, 1
      %s26 = ssub.s32 %s20, 2
      %s27 = sadd.s32 %s20, 1
      %s28 = ssub.s32 %s20, %s27
      %p29 = scmp.eq.s32.totalorder %s28, 0
      %s31 = sadd.s32 %s30, 1
      %s32 = scalar_select %p29, %s30, %s31
      %p35 = pneg %p29
      %p36 = scmp.eq.s32.totalorder %s20, 1
      %p37 = por %p35, %p36
      %p38 = scmp.ne.s32.totalorder %s30, %s33
      %p39 = scmp.eq.s32.totalorder %s20, 0
      %p40 = por %p38, %p39
      %p41 = scmp.ne.s32.totalorder %s30, %s33
      %p42 = scmp.eq.s32.totalorder %s25, 1
      %p43 = por %p41, %p42
      %p44 = scmp.ne.s32.totalorder %s33, %s34
      %p45 = scmp.eq.s32.totalorder %s25, 0
      %p46 = por %p44, %p45
      %p47 = scmp.ne.s32.totalorder %s33, %s34
      %p48 = scmp.eq.s32.totalorder %s26, 1
      %p49 = por %p47, %p48
      %p51 = scmp.ne.s32.totalorder %s34, %s50
      %p52 = scmp.eq.s32.totalorder %s26, 0
      %p53 = por %p51, %p52
      %s54 = ssub.s32 %s20, %s27
      %p55 = scmp.eq.s32.totalorder %s54, 0
      %s57 = sadd.s32 %s56, 1
      %s58 = scalar_select %p55, %s56, %s57
      %p61 = pneg %p55
      %p62 = scmp.eq.s32.totalorder %s20, 1
      %p63 = por %p61, %p62
      %p64 = scmp.ne.s32.totalorder %s56, %s59
      %p65 = scmp.eq.s32.totalorder %s20, 0
      %p66 = por %p64, %p65
      %p67 = scmp.ne.s32.totalorder %s56, %s59
      %p68 = scmp.eq.s32.totalorder %s25, 1
      %p69 = por %p67, %p68
      %p70 = scmp.ne.s32.totalorder %s59, %s60
      %p71 = scmp.eq.s32.totalorder %s25, 0
      %p72 = por %p70, %p71
      %p73 = scmp.ne.s32.totalorder %s59, %s60
      %p74 = scmp.eq.s32.totalorder %s26, 1
      %p75 = por %p73, %p74
      %p77 = scmp.ne.s32.totalorder %s60, %s76
      %p78 = scmp.eq.s32.totalorder %s26, 0
      %p79 = por %p77, %p78
      %s80 = ssub.s32 %s20, %s27
      %p81 = scmp.eq.s32.totalorder %s80, 0
      %s83 = sadd.s32 %s82, 1
      %s84 = scalar_select %p81, %s82, %s83
      %p87 = pneg %p81
      %p88 = scmp.eq.s32.totalorder %s20, 1
      %p89 = por %p87, %p88
      %p90 = scmp.ne.s32.totalorder %s82, %s85
      %p91 = scmp.eq.s32.totalorder %s20, 0
      %p92 = por %p90, %p91
      %p93 = scmp.ne.s32.totalorder %s82, %s85
      %p94 = scmp.eq.s32.totalorder %s25, 1
      %p95 = por %p93, %p94
      %p96 = scmp.ne.s32.totalorder %s85, %s86
      %p97 = scmp.eq.s32.totalorder %s25, 0
      %p98 = por %p96, %p97
      %p99 = scmp.ne.s32.totalorder %s85, %s86
      %p100 = scmp.eq.s32.totalorder %s26, 1
      %p101 = por %p99, %p100
      %p103 = scmp.ne.s32.totalorder %s86, %s102
      %p104 = scmp.eq.s32.totalorder %s26, 0
      %p105 = por %p103, %p104
      %s106 = ssub.s32 %s20, %s27
      %p107 = scmp.eq.s32.totalorder %s106, 0
      %s109 = sadd.s32 %s108, 1
      %s110 = scalar_select %p107, %s108, %s109
      %p113 = pneg %p107
      %p114 = scmp.eq.s32.totalorder %s20, 1
      %p115 = por %p113, %p114
      %p116 = scmp.ne.s32.totalorder %s108, %s111
      %p117 = scmp.eq.s32.totalorder %s20, 0
      %p118 = por %p116, %p117
      %p119 = scmp.ne.s32.totalorder %s108, %s111
      %p120 = scmp.eq.s32.totalorder %s25, 1
      %p121 = por %p119, %p120
      %p122 = scmp.ne.s32.totalorder %s111, %s112
      %p123 = scmp.eq.s32.totalorder %s25, 0
      %p124 = por %p122, %p123
      %p125 = scmp.ne.s32.totalorder %s111, %s112
      %p126 = scmp.eq.s32.totalorder %s26, 1
      %p127 = por %p125, %p126
      %p129 = scmp.ne.s32.totalorder %s112, %s128
      %p130 = scmp.eq.s32.totalorder %s26, 0
      %p131 = por %p129, %p130
      %s132 = ssub.s32 %s20, %s27
      %p133 = scmp.eq.s32.totalorder %s132, 0
      %s135 = sadd.s32 %s134, 1
      %s136 = scalar_select %p133, %s134, %s135
      %p139 = pneg %p133
      %p140 = scmp.eq.s32.totalorder %s20, 1
      %p141 = por %p139, %p140
      %p142 = scmp.ne.s32.totalorder %s134, %s137
      %p143 = scmp.eq.s32.totalorder %s20, 0
      %p144 = por %p142, %p143
      %p145 = scmp.ne.s32.totalorder %s134, %s137
      %p146 = scmp.eq.s32.totalorder %s25, 1
      %p147 = por %p145, %p146
      %p148 = scmp.ne.s32.totalorder %s137, %s138
      %p149 = scmp.eq.s32.totalorder %s25, 0
      %p150 = por %p148, %p149
      %p151 = scmp.ne.s32.totalorder %s137, %s138
      %p152 = scmp.eq.s32.totalorder %s26, 1
      %p153 = por %p151, %p152
      %p155 = scmp.ne.s32.totalorder %s138, %s154
      %p156 = scmp.eq.s32.totalorder %s26, 0
      %p157 = por %p155, %p156
      %p158 = scmp.le.s32.totalorder 1, %s20
      %p159 = scmp.lt.s32.totalorder %s20, 3
      %p160 = pnand %p158, %p159
      %p161 = pneg %p160
      // Predicated region
      $region9: #{tpu_custom_call.1} parent=5 // pred_check
        _
      $region10: #{tpu_custom_call.1} parent=5 // pred_check_branch
        %163 = sbr.rel (%p160) target = $region12
      $region11: #{tpu_custom_call.1} parent=5 // pred_region
        %s164 = ssub.s32 %s20, 1
      $region12: #{tpu_custom_call.1} parent=5 // pred_fallthru
        _
      %p165 = scmp.lt.s32.totalorder %s20, 2
      // Predicated region
      $region13: #{tpu_custom_call.1} parent=5 // pred_check
        %p166 = pneg %p165
      $region14: #{tpu_custom_call.1} parent=5 // pred_check_branch
        %168 = sbr.rel (%p166) target = $region16
      $region15: #{tpu_custom_call.1} parent=5 // pred_region
        // Predicated region
        $region17: #{tpu_custom_call.1} parent=15 // pred_check
          %p169 = pneg %p40
        $region18: #{tpu_custom_call.1} parent=15 // pred_check_branch
          %171 = sbr.rel (%p169) target = $region20
        $region19: #{tpu_custom_call.1} parent=15 // pred_region
          %p172 = scmp.lt.s32.totalorder %s20, 1
          %s173 = scalar_select %p172, %s20, 1
          %s174 = smul.addr %s173, 8
          %s175 = scalar_lea.vmem %s0, %s174
        $region20: #{tpu_custom_call.1} parent=15 // pred_fallthru
          _
        // Predicated region
        $region21: #{tpu_custom_call.1} parent=15 // pred_check
          %p176 = pneg %p66
        $region22: #{tpu_custom_call.1} parent=15 // pred_check_branch
          %178 = sbr.rel (%p176) target = $region24
        $region23: #{tpu_custom_call.1} parent=15 // pred_region
          %s179 = sand.u32 %s56, 1
          %s180 = scalar_lea.sflag [#allocation3], %s179
          %s181 = sand.u32 %s56, 1
          %s182 = smul.addr %s181, 8
          %s183 = scalar_lea.vmem [#allocation2], %s182
          %185 = vsyncadd %s180, 0
          %s186 = smul.addr %s20, 8
          %s187 = scalar_lea.hbm %s1, %s186
          %s189 = sshll.u32 %s187, 4
          %s190 = int_to_ptr.hbm [resolvable:$true] %s189
          %s191 = sshll.u32 %s183, 4
          %s192 = int_to_ptr.vmem [resolvable:$true] %s191
          %194 = dma.hbm_to_vmem [thread:$0]  %s190, 128, %s192, %s180
        $region24: #{tpu_custom_call.1} parent=15 // pred_fallthru
          _
        // Predicated region
        $region25: #{tpu_custom_call.1} parent=15 // pred_check
          %p195 = pneg %p92
        $region26: #{tpu_custom_call.1} parent=15 // pred_check_branch
          %197 = sbr.rel (%p195) target = $region28
        $region27: #{tpu_custom_call.1} parent=15 // pred_region
          %p198 = scmp.lt.s32.totalorder %s20, 1
          %s199 = scalar_select %p198, %s20, 1
          %s200 = smul.addr %s199, 8
          %s201 = scalar_lea.vmem %s2, %s200
        $region28: #{tpu_custom_call.1} parent=15 // pred_fallthru
          _
      $region16: #{tpu_custom_call.1} parent=5 // pred_fallthru
        _
      %p202 = scmp.le.s32.totalorder 1, %s20
      %p203 = scmp.lt.s32.totalorder %s20, 3
      %p204 = pnand %p202, %p203
      %p205 = pneg %p204
      // Predicated region
      $region29: #{tpu_custom_call.1} parent=5 // pred_check
        _
      $region30: #{tpu_custom_call.1} parent=5 // pred_check_branch
        %207 = sbr.rel (%p204) target = $region32
      $region31: #{tpu_custom_call.1} parent=5 // pred_region
        %s208 = ssub.s32 %s20, 1
        %s209 = sand.u32 %s59, 1
        %s210 = scalar_lea.sflag [#allocation3], %s209
        %s211 = sand.u32 %s59, 1
        %s212 = smul.addr %s211, 8
        %s213 = scalar_lea.vmem [#allocation2], %s212
        // Predicated region
        $region33: #{tpu_custom_call.1} parent=31 // pred_check
          %p214 = pneg %p72
        $region34: #{tpu_custom_call.1} parent=31 // pred_check_branch
          %216 = sbr.rel (%p214) target = $region36
        $region35: #{tpu_custom_call.1} parent=31 // pred_region
          %218 = dma.done %s210, 128
        $region36: #{tpu_custom_call.1} parent=31 // pred_fallthru
          _
        %p219 = scmp.lt.s32.totalorder %s25, 1
        %s220 = scalar_select %p219, %s25, 1
        %s221 = smul.addr %s220, 8
        %s222 = scalar_lea.vmem %s0, %s221
        %p223 = pneg %p46
        %p224 = pneg %p43
        %s225 = sand.u32 %s59, 1
        %s226 = scalar_lea.sflag [#allocation3], %s225
        %s227 = sand.u32 %s59, 1
        %s228 = smul.addr %s227, 8
        %s229 = scalar_lea.vmem [#allocation2], %s228
        %p230 = pneg %p72
        %p231 = pneg %p69
        %p232 = scmp.lt.s32.totalorder %s25, 1
        %s233 = scalar_select %p232, %s25, 1
        %s234 = smul.addr %s233, 8
        %s235 = scalar_lea.vmem %s2, %s234
        %p236 = pneg %p98
        %p237 = pneg %p95
        %p238 = pneg %p124
        %p239 = pneg %p121
        %s240 = sand.u32 %s111, 1
        %s241 = scalar_lea.sflag [#allocation4], %s240
        %s242 = sand.u32 %s111, 1
        %s243 = smul.addr %s242, 8
        %s244 = scalar_lea.vmem [#allocation5], %s243
        %p245 = pneg %p150
        %p246 = pneg %p147
        %s247 = sand.u32 %s137, 1
        %s248 = scalar_lea.sflag [#allocation7], %s247
        %s249 = sand.u32 %s137, 1
        %s250 = smul.addr %s249, 8
        %s251 = scalar_lea.vmem [#allocation6], %s250
        %p252 = scmp.lt.s32.totalorder %s25, 1
        %s253 = scalar_select %p252, %s25, 1
        %s254 = smul.addr %s253, 8
        %s255 = scalar_lea.vmem %s0, %s254
        %p256 = scmp.lt.s32.totalorder %s25, 1
        %s257 = scalar_select %p256, %s25, 1
        %s258 = smul.addr %s257, 8
        %s259 = scalar_lea.vmem %s2, %s258
        %v260 = vld [vmem:[%s255] sm:$0xff]
        %v261 = vld [vmem:[%s213] sm:$0xff]
        %v262 = vld [vmem:[%s259] sm:$0xff]
        %264 = vset.pattern.permute.xlu0 0
        %265 = vperm.xlu0 %264, %v262
        %v266 = vpop.permute.xlu0 %265
        %vm268 = vcmp.ge.f32.partialorder %v260, %v266
        %vm269 = vcmp.ge.f32.partialorder %v261, %v266
        %vm270 = vmand %vm268, %vm269
        %v271 = vsel %vm270, 1, 0
        %v272 = vcvt.s32.f32 %v271
        %v273 = vadd.f32 %v272, 0.0
        %v274 = vsel %vm268, 1, 0
        %v275 = vcvt.s32.f32 %v274
        %v276 = vadd.f32 %v275, 0.0
        %277 = vst [vmem:[%s244] sm:$0xff] %v273
        %278 = vst [vmem:[%s251] sm:$0xff] %v276
        %s279 = sand.u32 %s111, 1
        %s280 = scalar_lea.sflag [#allocation4], %s279
        %s281 = sand.u32 %s111, 1
        %s282 = smul.addr %s281, 8
        %s283 = scalar_lea.vmem [#allocation5], %s282
        %s284 = sand.u32 %s137, 1
        %s285 = scalar_lea.sflag [#allocation7], %s284
        %s286 = sand.u32 %s137, 1
        %s287 = smul.addr %s286, 8
        %s288 = scalar_lea.vmem [#allocation6], %s287
        // Predicated region
        $region37: #{tpu_custom_call.1} parent=31 // pred_check
          %p289 = pneg %p121
        $region38: #{tpu_custom_call.1} parent=31 // pred_check_branch
          %291 = sbr.rel (%p289) target = $region40
        $region39: #{tpu_custom_call.1} parent=31 // pred_region
          %293 = vsyncadd %s280, 0
          %s294 = smul.addr %s25, 8
          %s295 = scalar_lea.hbm %s3, %s294
          %s297 = sshll.u32 %s283, 4
          %s298 = int_to_ptr.vmem [resolvable:$true] %s297
          %s299 = sshll.u32 %s295, 4
          %s300 = int_to_ptr.hbm [resolvable:$true] %s299
          %302 = dma.vmem_to_hbm [thread:$0]  %s298, 128, %s300, %s280
        $region40: #{tpu_custom_call.1} parent=31 // pred_fallthru
          _
        // Predicated region
        $region41: #{tpu_custom_call.1} parent=31 // pred_check
          %p303 = pneg %p147
        $region42: #{tpu_custom_call.1} parent=31 // pred_check_branch
          %305 = sbr.rel (%p303) target = $region44
        $region43: #{tpu_custom_call.1} parent=31 // pred_region
          %307 = vsyncadd %s285, 0
          %s308 = smul.addr %s25, 8
          %s309 = scalar_lea.hbm %s4, %s308
          %s311 = sshll.u32 %s288, 4
          %s312 = int_to_ptr.vmem [resolvable:$true] %s311
          %s313 = sshll.u32 %s309, 4
          %s314 = int_to_ptr.hbm [resolvable:$true] %s313
          %316 = dma.vmem_to_hbm [thread:$0]  %s312, 128, %s314, %s285
        $region44: #{tpu_custom_call.1} parent=31 // pred_fallthru
          _
      $region32: #{tpu_custom_call.1} parent=5 // pred_fallthru
        _
      %p317 = scmp.le.s32.totalorder 2, %s20
      // Predicated region
      $region45: #{tpu_custom_call.1} parent=5 // pred_check
        %p318 = pneg %p317
      $region46: #{tpu_custom_call.1} parent=5 // pred_check_branch
        %320 = sbr.rel (%p318) target = $region48
      $region47: #{tpu_custom_call.1} parent=5 // pred_region
        %s321 = ssub.s32 %s20, 2
        // Predicated region
        $region49: #{tpu_custom_call.1} parent=47 // pred_check
          %p322 = pneg %p127
        $region50: #{tpu_custom_call.1} parent=47 // pred_check_branch
          %324 = sbr.rel (%p322) target = $region52
        $region51: #{tpu_custom_call.1} parent=47 // pred_region
          %s325 = sand.u32 %s112, 1
          %s326 = scalar_lea.sflag [#allocation4], %s325
          %s327 = sand.u32 %s112, 1
          %s328 = smul.addr %s327, 8
          %s329 = scalar_lea.vmem [#allocation5], %s328
          %331 = dma.done %s326, 128
        $region52: #{tpu_custom_call.1} parent=47 // pred_fallthru
          _
        // Predicated region
        $region53: #{tpu_custom_call.1} parent=47 // pred_check
          %p332 = pneg %p153
        $region54: #{tpu_custom_call.1} parent=47 // pred_check_branch
          %334 = sbr.rel (%p332) target = $region56
        $region55: #{tpu_custom_call.1} parent=47 // pred_region
          %s335 = sand.u32 %s138, 1
          %s336 = scalar_lea.sflag [#allocation7], %s335
          %s337 = sand.u32 %s138, 1
          %s338 = smul.addr %s337, 8
          %s339 = scalar_lea.vmem [#allocation6], %s338
          %341 = dma.done %s336, 128
        $region56: #{tpu_custom_call.1} parent=47 // pred_fallthru
          _
      $region48: #{tpu_custom_call.1} parent=5 // pred_fallthru
        _
    $region6: #{tpu_custom_call.1} parent=1 // loop_footer
      %s24 = sadd.s32 1, %s20
    $region7: #{tpu_custom_call.1} parent=1 // loop_footer_branch
      %19 = sbr.rel target = $region3
    $region8: #{tpu_custom_call.1} parent=1 // loop_exit
      _
    %342 = vsyncpa [#allocation3], 1
    %s343 = scalar_lea.sflag [#allocation3], 1
    %344 = vsyncpa %s343, 1
    %345 = vsyncpa [#allocation4], 1
    %s346 = scalar_lea.sflag [#allocation4], 1
    %347 = vsyncpa %s346, 1
    %348 = vsyncpa [#allocation7], 1
    %s349 = scalar_lea.sflag [#allocation7], 1
    %350 = vsyncpa %s349, 1

</llo_original>
